<compile_context>
chip_gen: v5e
topology: v5e:2x2
jax: 0.10.0
libtpu: 0.0.40
codegen_flags: <defaults>
</compile_context>

<pallas_src>
import numpy as np
import jax
import jax.numpy as jnp
from jax.experimental import pallas as pl
from jax.experimental.pallas import tpu as pltpu


def _row_sums_lane_major(terms):
    """(TB, N) f32 -> (1, TB) f32 row sums, produced lane-major via an NT
    matmul with a ones vector (q @ k.T-style dimension numbers, MXU path)."""
    ones = jnp.ones((1, terms.shape[1]), jnp.float32)
    return jax.lax.dot_general(
        ones, terms,
        dimension_numbers=(((1,), (1,)), ((), ())),   # contract both on dim 1 (NT)
        preferred_element_type=jnp.float32,
    )


def _sigmoid_direct_kernel(x_ref, out_ref, logdet_ref):
    x = x_ref[...].astype(jnp.float32)
    ax = jnp.abs(x)
    e = jnp.exp(-ax)                         # one EUP exp, never overflows
    r = 1.0 / (1.0 + e)
    s = jnp.where(x >= 0.0, r, e * r)        # numerically stable sigmoid
    out_ref[...] = s.astype(out_ref.dtype)
    # log(s * (1 - s)) == -(|x| + 2*log(1 + e)); 1 <= 1+e <= 2 so plain log is stable.
    terms = -(ax + 2.0 * jnp.log(1.0 + e))
    logdet_ref[...] = _row_sums_lane_major(terms)


def _sigmoid_inverse_kernel(x_ref, out_ref, logdet_ref):
    x = x_ref[...].astype(jnp.float32)
    lx = jnp.log(x)
    l1mx = jnp.log(1.0 - x)
    out_ref[...] = (lx - l1mx).astype(out_ref.dtype)      # log(x / (1 - x))
    # log(x - x^2) == log(x) + log(1 - x): reuse both logs, no divide.
    logdet_ref[...] = -_row_sums_lane_major(lx + l1mx)


def _round_up(x, m):
    return ((x + m - 1) // m) * m


def _batch_tile(B, N, itemsize):
    """Rows per grid step.  Either the whole batch (small / awkward B;
    full-dim blocks sidestep the (8,128) tiling rule) or a multiple of 128 so
    the lane-major (1, TB) logdet block satisfies the lane-tiling constraint
    (also a multiple of bf16's 16-row sublane packing for free)."""
    if B <= 256:
        return B
    padded_n = _round_up(N, 128)                       # VMEM blocks are lane-padded
    # double-buffered input + output blocks (input dtype) + ~2 live f32 temps
    bytes_per_row = padded_n * (4 * itemsize + 8)
    budget = 12 << 20                                  # fits v7x 32 MiB scoped VMEM
    tb = max(128, min((budget // bytes_per_row) // 128 * 128, 1024))
    # keep >= 2 grid steps so "parallel" can shard across v7x's two TensorCores
    tb = min(tb, _round_up((B + 1) // 2, 128))
    return tb


class Sigmoid:
    """JAX/Pallas port of the PyTorch Sigmoid flow layer."""

    def __call__(self, inputs, cond_inputs=None, mode="direct"):
        # cond_inputs is ignored, exactly like the PyTorch module.
        B, N = inputs.shape
        TB = _batch_tile(B, N, inputs.dtype.itemsize)
        kernel = _sigmoid_direct_kernel if mode == "direct" else _sigmoid_inverse_kernel

        out, logdet = pl.pallas_call(
            kernel,
            out_shape=(
                jax.ShapeDtypeStruct((B, N), inputs.dtype),
                # lane-dense, f32 logdet row; reshaped to (B, 1) below
                jax.ShapeDtypeStruct((1, B), jnp.float32),
            ),
            grid_spec=pltpu.PrefetchScalarGridSpec(
                num_scalar_prefetch=0,
                grid=(pl.cdiv(B, TB),),
                in_specs=[pl.BlockSpec((TB, N), lambda i: (i, 0))],
                out_specs=[
                    pl.BlockSpec((TB, N), lambda i: (i, 0)),
                    pl.BlockSpec((1, TB), lambda i: (0, i)),
                ],
            ),
            compiler_params=pltpu.CompilerParams(
                dimension_semantics=("parallel",),   # batch tiles are independent
                vmem_limit_bytes=32 << 20,
            ),
        )(inputs)
        # Match the PyTorch module: logdet shape (B, 1), same dtype as inputs.
        return out, logdet.reshape(B, 1).astype(inputs.dtype)


if __name__ == "__main__":
    batch = 64
    num_inputs = 32

    key = jax.random.PRNGKey(0)
    x = jax.random.normal(key, (batch, num_inputs), dtype=jnp.float32)

    layer = Sigmoid()

    # ---- direct mode -------------------------------------------------------
    out_d, logdet_d = layer(x, mode="direct")
    out_d = jax.block_until_ready(out_d)
    logdet_d = jax.block_until_ready(logdet_d)

    x_np = np.asarray(x, dtype=np.float64)
    s_ref = 1.0 / (1.0 + np.exp(-x_np))
    ld_ref = np.log(s_ref * (1.0 - s_ref)).sum(-1, keepdims=True)
    np.testing.assert_allclose(np.asarray(out_d), s_ref, rtol=1e-5, atol=1e-5)
    np.testing.assert_allclose(np.asarray(logdet_d), ld_ref, rtol=1e-4, atol=1e-4)
    assert logdet_d.shape == (batch, 1)

    # ---- inverse mode (should undo direct) ---------------------------------
    out_i, logdet_i = layer(out_d, mode="inverse")
    out_i = jax.block_until_ready(out_i)
    logdet_i = jax.block_until_ready(logdet_i)

    ld_inv_ref = -np.log(s_ref - s_ref ** 2).sum(-1, keepdims=True)
    np.testing.assert_allclose(np.asarray(out_i), x_np, rtol=1e-4, atol=1e-4)
    np.testing.assert_allclose(np.asarray(logdet_i), ld_inv_ref, rtol=1e-4, atol=1e-4)

    print("KERNEL_OK")
</pallas_src>

<mosaic_0001>
module attributes {stable_mosaic.version = 11 : i64} {
  func.func @_sigmoid_direct_kernel(%arg0: i32, %arg1: memref<64x32xf32, #tpu.memory_space<vmem>>, %arg2: memref<64x32xf32, #tpu.memory_space<vmem>>, %arg3: memref<1x64xf32, #tpu.memory_space<vmem>>) attributes {dimension_semantics = [#tpu.dimension_semantics<parallel>], iteration_bounds = array<i64: 1>, scalar_prefetch = 0 : i64, scratch_operands = 0 : i64, tpu.core_type = #tpu.core_type<tc>, window_params = [{transform_indices = @transform_0, window_bounds = array<i64: 64, 32>}, {transform_indices = @transform_1, window_bounds = array<i64: 64, 32>}, {transform_indices = @transform_2, window_bounds = array<i64: 1, 64>}]} {
    %c0 = arith.constant 0 : index
    %c0_0 = arith.constant 0 : index
    %0 = vector.load %arg1[%c0, %c0_0] : memref<64x32xf32, #tpu.memory_space<vmem>>, vector<64x32xf32>
    %1 = math.absf %0 : vector<64x32xf32>
    %cst = arith.constant 0.000000e+00 : f32
    %2 = vector.broadcast %cst : f32 to vector<64x32xf32>
    %3 = arith.subf %2, %1 : vector<64x32xf32>
    %4 = math.exp %3 : vector<64x32xf32>
    %cst_1 = arith.constant 1.000000e+00 : f32
    %5 = vector.broadcast %cst_1 : f32 to vector<64x32xf32>
    %6 = arith.addf %5, %4 : vector<64x32xf32>
    %cst_2 = arith.constant 1.000000e+00 : f32
    %7 = vector.broadcast %cst_2 : f32 to vector<64x32xf32>
    %8 = arith.divf %7, %6 : vector<64x32xf32>
    %cst_3 = arith.constant 0.000000e+00 : f32
    %9 = vector.broadcast %cst_3 : f32 to vector<64x32xf32>
    %10 = arith.cmpf oge, %0, %9 : vector<64x32xf32>
    %11 = arith.mulf %4, %8 : vector<64x32xf32>
    %12 = arith.select %10, %8, %11 : vector<64x32xi1>, vector<64x32xf32>
    %c0_4 = arith.constant 0 : index
    %c0_5 = arith.constant 0 : index
    %13 = vector.load %arg2[%c0_4, %c0_5] : memref<64x32xf32, #tpu.memory_space<vmem>>, vector<64x32xf32>
    tpu.vector_store %arg2[%c0_4, %c0_5], %12 {strides = array<i32>} : memref<64x32xf32, #tpu.memory_space<vmem>>, vector<64x32xf32>,
    %cst_6 = arith.constant 1.000000e+00 : f32
    %14 = vector.broadcast %cst_6 : f32 to vector<64x32xf32>
    %15 = arith.addf %14, %4 : vector<64x32xf32>
    %16 = math.log %15 : vector<64x32xf32>
    %cst_7 = arith.constant 2.000000e+00 : f32
    %17 = vector.broadcast %cst_7 : f32 to vector<64x32xf32>
    %18 = arith.mulf %17, %16 : vector<64x32xf32>
    %19 = arith.addf %1, %18 : vector<64x32xf32>
    %cst_8 = arith.constant 0.000000e+00 : f32
    %20 = vector.broadcast %cst_8 : f32 to vector<64x32xf32>
    %21 = arith.subf %20, %19 : vector<64x32xf32>
    %cst_9 = arith.constant 1.000000e+00 : f32
    %22 = vector.broadcast %cst_9 : f32 to vector<1x32xf32>
    %cst_10 = arith.constant dense<0.000000e+00> : vector<1x64xf32>
    %23 = tpu.matmul %22, %21, %cst_10 {dimension_numbers = #tpu.dot_dimension_numbers<[1], [1], [0], [0], [0, 0, 1, 0], [], []>} : vector<1x32xf32>, vector<64x32xf32>, vector<1x64xf32> -> vector<1x64xf32>
    %c0_11 = arith.constant 0 : index
    %c0_12 = arith.constant 0 : index
    %24 = vector.load %arg3[%c0_11, %c0_12] : memref<1x64xf32, #tpu.memory_space<vmem>>, vector<1x64xf32>
    tpu.vector_store %arg3[%c0_11, %c0_12], %23 {strides = array<i32>} : memref<1x64xf32, #tpu.memory_space<vmem>>, vector<1x64xf32>,
    return
  }
  func.func @transform_0(%arg0: i32) -> (i32, i32) {
    %c0_i32 = arith.constant 0 : i32
    %c0_i32_0 = arith.constant 0 : i32
    return %arg0, %c0_i32 : i32, i32
  }
  func.func @transform_1(%arg0: i32) -> (i32, i32) {
    %c0_i32 = arith.constant 0 : i32
    %c0_i32_0 = arith.constant 0 : i32
    return %arg0, %c0_i32 : i32, i32
  }
  func.func @transform_2(%arg0: i32) -> (i32, i32) {
    %c0_i32 = arith.constant 0 : i32
    %c0_i32_0 = arith.constant 0 : i32
    return %c0_i32, %arg0 : i32, i32
  }
}

</mosaic_0001>

<llo_original>
// kernel: tpu_custom_call.1
$region0: #{tpu_custom_call.1}
  #allocation0 [shape = 'u32[]', space=smem, size = 0x4, offset = 0x4, fixed_abs, tag = 'smem constant byte address 0x4 - core index']
  #allocation1 [shape = 'u32[72,128]{1,0:T(1,128)}', space=vmem, size = 0x9000, scoped, tag = 'internal scratch']
  %s0 = inlined_call_operand.vmem [shape: f32[64,32], index: 0, kind: input, shape index: {}]
  %s1 = inlined_call_operand.vmem [shape: f32[64,32], index: 1, kind: output, shape index: {0}]
  %s2 = inlined_call_operand.hbm [shape: f32[1,64], index: 2, kind: output, shape index: {1}]
  %3 = xla_tuple %s1, %s2
  %s4 = sld [smem:[#allocation0]]
  $region22: #{tpu_custom_call.1} parent=0
    _
  %s6 = ssub.s32 1, %s4
  %s7 = scalar_select 0, %s6, %s4
  $region1: #{tpu_custom_call.1} parent=0
    #allocation2 [shape = 'u8[512]{0}', space=vmem, size = 0x400, scoped, tag = 'output window, operand 1, single buffered']
    #allocation3 [shape = 's32[1]{0}', space=sflag, size = 0x4, scoped, tag = 'scoped memory for tpu_custom_call.1']
    %8 = vsyncpa [#allocation3], 0
    // Predicated region
    $region2: #{tpu_custom_call.1} parent=1 // pred_check
      _
    $region3: #{tpu_custom_call.1} parent=1 // pred_check_branch
      %10 = sbr.rel (0) target = $region5
    $region4: #{tpu_custom_call.1} parent=1 // pred_region
      _
    $region5: #{tpu_custom_call.1} parent=1 // pred_fallthru
      _
    %v11 = vld [vmem:[%s0] sm:$0xff]
    %v12 = vld [vmem:[%s0 + $0x8] sm:$0xff]
    %v13 = vld [vmem:[%s0 + $0x10] sm:$0xff]
    %v14 = vld [vmem:[%s0 + $0x18] sm:$0xff]
    %v15 = vld [vmem:[%s0 + $0x20] sm:$0xff]
    %v16 = vld [vmem:[%s0 + $0x28] sm:$0xff]
    %v17 = vld [vmem:[%s0 + $0x30] sm:$0xff]
    %v18 = vld [vmem:[%s0 + $0x38] sm:$0xff]
    %v19 = vand.u32 2147483647, %v11
    %v20 = vand.u32 2147483647, %v12
    %v21 = vand.u32 2147483647, %v13
    %v22 = vand.u32 2147483647, %v14
    %v23 = vand.u32 2147483647, %v15
    %v24 = vand.u32 2147483647, %v16
    %v25 = vand.u32 2147483647, %v17
    %v26 = vand.u32 2147483647, %v18
    %v27 = vsub.f32 0.0, %v19
    %v28 = vsub.f32 0.0, %v20
    %v29 = vsub.f32 0.0, %v21
    %v30 = vsub.f32 0.0, %v22
    %v31 = vsub.f32 0.0, %v23
    %v32 = vsub.f32 0.0, %v24
    %v33 = vsub.f32 0.0, %v25
    %v34 = vsub.f32 0.0, %v26
    %v35 = vmul.f32 %v27, 1.442695
    %v36 = vpow.pop %v35
    %v37 = vmul.f32 %v28, 1.442695
    %v38 = vpow.pop %v37
    %v39 = vmul.f32 %v29, 1.442695
    %v40 = vpow.pop %v39
    %v41 = vmul.f32 %v30, 1.442695
    %v42 = vpow.pop %v41
    %v43 = vmul.f32 %v31, 1.442695
    %v44 = vpow.pop %v43
    %v45 = vmul.f32 %v32, 1.442695
    %v46 = vpow.pop %v45
    %v47 = vmul.f32 %v33, 1.442695
    %v48 = vpow.pop %v47
    %v49 = vmul.f32 %v34, 1.442695
    %v50 = vpow.pop %v49
    %v51 = vadd.f32 %v36, 1.0
    %v52 = vadd.f32 %v38, 1.0
    %v53 = vadd.f32 %v40, 1.0
    %v54 = vadd.f32 %v42, 1.0
    %v55 = vadd.f32 %v44, 1.0
    %v56 = vadd.f32 %v46, 1.0
    %v57 = vadd.f32 %v48, 1.0
    %v58 = vadd.f32 %v50, 1.0
    %v59 = vrcp.pop %v51
    %v60 = vmul.f32 %v51, %v59
    %v61 = vsub.f32 1.0, %v60
    %v62 = vmul.f32 %v59, %v61
    %v63 = vadd.f32 %v59, %v62
    %vm64 = vweird.f32 %v51
    %vm65 = vweird.f32 %v59
    %vm66 = vmor %vm64, %vm65
    %v67 = vsel %vm66, %v59, %v63
    %v68 = vand.u32 2147483647, %v51
    %vm69 = vcmp.eq.f32.partialorder %v68, 8.507059e+37
    %v70 = vand.u32 %v51, 2147483648
    %v71 = vor.u32 1.1754944e-38, %v70
    %v72 = vsel %vm69, %v71, %v67
    %v73 = vmul.f32 1.0, %v72
    %v74 = vrcp.pop %v52
    %v75 = vmul.f32 %v52, %v74
    %v76 = vsub.f32 1.0, %v75
    %v77 = vmul.f32 %v74, %v76
    %v78 = vadd.f32 %v74, %v77
    %vm79 = vweird.f32 %v52
    %vm80 = vweird.f32 %v74
    %vm81 = vmor %vm79, %vm80
    %v82 = vsel %vm81, %v74, %v78
    %v83 = vand.u32 2147483647, %v52
    %vm84 = vcmp.eq.f32.partialorder %v83, 8.507059e+37
    %v85 = vand.u32 %v52, 2147483648
    %v86 = vor.u32 1.1754944e-38, %v85
    %v87 = vsel %vm84, %v86, %v82
    %v88 = vmul.f32 1.0, %v87
    %v89 = vrcp.pop %v53
    %v90 = vmul.f32 %v53, %v89
    %v91 = vsub.f32 1.0, %v90
    %v92 = vmul.f32 %v89, %v91
    %v93 = vadd.f32 %v89, %v92
    %vm94 = vweird.f32 %v53
    %vm95 = vweird.f32 %v89
    %vm96 = vmor %vm94, %vm95
    %v97 = vsel %vm96, %v89, %v93
    %v98 = vand.u32 2147483647, %v53
    %vm99 = vcmp.eq.f32.partialorder %v98, 8.507059e+37
    %v100 = vand.u32 %v53, 2147483648
    %v101 = vor.u32 1.1754944e-38, %v100
    %v102 = vsel %vm99, %v101, %v97
    %v103 = vmul.f32 1.0, %v102
    %v104 = vrcp.pop %v54
    %v105 = vmul.f32 %v54, %v104
    %v106 = vsub.f32 1.0, %v105
    %v107 = vmul.f32 %v104, %v106
    %v108 = vadd.f32 %v104, %v107
    %vm109 = vweird.f32 %v54
    %vm110 = vweird.f32 %v104
    %vm111 = vmor %vm109, %vm110
    %v112 = vsel %vm111, %v104, %v108
    %v113 = vand.u32 2147483647, %v54
    %vm114 = vcmp.eq.f32.partialorder %v113, 8.507059e+37
    %v115 = vand.u32 %v54, 2147483648
    %v116 = vor.u32 1.1754944e-38, %v115
    %v117 = vsel %vm114, %v116, %v112
    %v118 = vmul.f32 1.0, %v117
    %v119 = vrcp.pop %v55
    %v120 = vmul.f32 %v55, %v119
    %v121 = vsub.f32 1.0, %v120
    %v122 = vmul.f32 %v119, %v121
    %v123 = vadd.f32 %v119, %v122
    %vm124 = vweird.f32 %v55
    %vm125 = vweird.f32 %v119
    %vm126 = vmor %vm124, %vm125
    %v127 = vsel %vm126, %v119, %v123
    %v128 = vand.u32 2147483647, %v55
    %vm129 = vcmp.eq.f32.partialorder %v128, 8.507059e+37
    %v130 = vand.u32 %v55, 2147483648
    %v131 = vor.u32 1.1754944e-38, %v130
    %v132 = vsel %vm129, %v131, %v127
    %v133 = vmul.f32 1.0, %v132
    %v134 = vrcp.pop %v56
    %v135 = vmul.f32 %v56, %v134
    %v136 = vsub.f32 1.0, %v135
    %v137 = vmul.f32 %v134, %v136
    %v138 = vadd.f32 %v134, %v137
    %vm139 = vweird.f32 %v56
    %vm140 = vweird.f32 %v134
    %vm141 = vmor %vm139, %vm140
    %v142 = vsel %vm141, %v134, %v138
    %v143 = vand.u32 2147483647, %v56
    %vm144 = vcmp.eq.f32.partialorder %v143, 8.507059e+37
    %v145 = vand.u32 %v56, 2147483648
    %v146 = vor.u32 1.1754944e-38, %v145
    %v147 = vsel %vm144, %v146, %v142
    %v148 = vmul.f32 1.0, %v147
    %v149 = vrcp.pop %v57
    %v150 = vmul.f32 %v57, %v149
    %v151 = vsub.f32 1.0, %v150
    %v152 = vmul.f32 %v149, %v151
    %v153 = vadd.f32 %v149, %v152
    %vm154 = vweird.f32 %v57
    %vm155 = vweird.f32 %v149
    %vm156 = vmor %vm154, %vm155
    %v157 = vsel %vm156, %v149, %v153
    %v158 = vand.u32 2147483647, %v57
    %vm159 = vcmp.eq.f32.partialorder %v158, 8.507059e+37
    %v160 = vand.u32 %v57, 2147483648
    %v161 = vor.u32 1.1754944e-38, %v160
    %v162 = vsel %vm159, %v161, %v157
    %v163 = vmul.f32 1.0, %v162
    %v164 = vrcp.pop %v58
    %v165 = vmul.f32 %v58, %v164
    %v166 = vsub.f32 1.0, %v165
    %v167 = vmul.f32 %v164, %v166
    %v168 = vadd.f32 %v164, %v167
    %vm169 = vweird.f32 %v58
    %vm170 = vweird.f32 %v164
    %vm171 = vmor %vm169, %vm170
    %v172 = vsel %vm171, %v164, %v168
    %v173 = vand.u32 2147483647, %v58
    %vm174 = vcmp.eq.f32.partialorder %v173, 8.507059e+37
    %v175 = vand.u32 %v58, 2147483648
    %v176 = vor.u32 1.1754944e-38, %v175
    %v177 = vsel %vm174, %v176, %v172
    %v178 = vmul.f32 1.0, %v177
    %vm179 = vcmp.ge.f32.partialorder %v11, 0.0
    %vm180 = vcmp.ge.f32.partialorder %v12, 0.0
    %vm181 = vcmp.ge.f32.partialorder %v13, 0.0
    %vm182 = vcmp.ge.f32.partialorder %v14, 0.0
    %vm183 = vcmp.ge.f32.partialorder %v15, 0.0
    %vm184 = vcmp.ge.f32.partialorder %v16, 0.0
    %vm185 = vcmp.ge.f32.partialorder %v17, 0.0
    %vm186 = vcmp.ge.f32.partialorder %v18, 0.0
    %v187 = vmul.f32 %v36, %v73
    %v188 = vmul.f32 %v38, %v88
    %v189 = vmul.f32 %v40, %v103
    %v190 = vmul.f32 %v42, %v118
    %v191 = vmul.f32 %v44, %v133
    %v192 = vmul.f32 %v46, %v148
    %v193 = vmul.f32 %v48, %v163
    %v194 = vmul.f32 %v50, %v178
    %v195 = vsel %vm179, %v73, %v187
    %v196 = vsel %vm180, %v88, %v188
    %v197 = vsel %vm181, %v103, %v189
    %v198 = vsel %vm182, %v118, %v190
    %v199 = vsel %vm183, %v133, %v191
    %v200 = vsel %vm184, %v148, %v192
    %v201 = vsel %vm185, %v163, %v193
    %v202 = vsel %vm186, %v178, %v194
    %vm203 = vcmask 261120
    %204 = vst.msk [vmem:[%s1] sm:$0xff] %vm203, %v195
    %205 = vst.msk [vmem:[%s1 + $0x8] sm:$0xff] %vm203, %v196
    %206 = vst.msk [vmem:[%s1 + $0x10] sm:$0xff] %vm203, %v197
    %207 = vst.msk [vmem:[%s1 + $0x18] sm:$0xff] %vm203, %v198
    %208 = vst.msk [vmem:[%s1 + $0x20] sm:$0xff] %vm203, %v199
    %209 = vst.msk [vmem:[%s1 + $0x28] sm:$0xff] %vm203, %v200
    %210 = vst.msk [vmem:[%s1 + $0x30] sm:$0xff] %vm203, %v201
    %211 = vst.msk [vmem:[%s1 + $0x38] sm:$0xff] %vm203, %v202
    %v212 = vlog2.pop %v51
    %v213 = vmul.f32 %v212, 0.6931472
    %v214 = vlog2.pop %v52
    %v215 = vmul.f32 %v214, 0.6931472
    %v216 = vlog2.pop %v53
    %v217 = vmul.f32 %v216, 0.6931472
    %v218 = vlog2.pop %v54
    %v219 = vmul.f32 %v218, 0.6931472
    %v220 = vlog2.pop %v55
    %v221 = vmul.f32 %v220, 0.6931472
    %v222 = vlog2.pop %v56
    %v223 = vmul.f32 %v222, 0.6931472
    %v224 = vlog2.pop %v57
    %v225 = vmul.f32 %v224, 0.6931472
    %v226 = vlog2.pop %v58
    %v227 = vmul.f32 %v226, 0.6931472
    %v228 = vmul.f32 %v213, 2.0
    %v229 = vmul.f32 %v215, 2.0
    %v230 = vmul.f32 %v217, 2.0
    %v231 = vmul.f32 %v219, 2.0
    %v232 = vmul.f32 %v221, 2.0
    %v233 = vmul.f32 %v223, 2.0
    %v234 = vmul.f32 %v225, 2.0
    %v235 = vmul.f32 %v227, 2.0
    %v236 = vadd.f32 %v19, %v228
    %v237 = vadd.f32 %v20, %v229
    %v238 = vadd.f32 %v21, %v230
    %v239 = vadd.f32 %v22, %v231
    %v240 = vadd.f32 %v23, %v232
    %v241 = vadd.f32 %v24, %v233
    %v242 = vadd.f32 %v25, %v234
    %v243 = vadd.f32 %v26, %v235
    %v244 = vsub.f32 0.0, %v236
    %v245 = vsub.f32 0.0, %v237
    %v246 = vsub.f32 0.0, %v238
    %v247 = vsub.f32 0.0, %v239
    %v248 = vsub.f32 0.0, %v240
    %v249 = vsub.f32 0.0, %v241
    %v250 = vsub.f32 0.0, %v242
    %v251 = vsub.f32 0.0, %v243
    %v253 = vsel %vm203, 1.0, 0
    %v256 = vsel %vm203, %v244, 0
    %v259 = vsel %vm203, %v245, 0
    %v262 = vsel %vm203, %v246, 0
    %v265 = vsel %vm203, %v247, 0
    %v268 = vsel %vm203, %v248, 0
    %v271 = vsel %vm203, %v249, 0
    %v274 = vsel %vm203, %v250, 0
    %v277 = vsel %vm203, %v251, 0
    %279 = vmatpush.xpose.msra.mxu0 0.0
    %280 = vmatpush.xpose.msra.mxu0 0.0
    %281 = vmatpush.xpose.msra.mxu0 0.0
    %282 = vmatpush.xpose.msra.mxu0 0.0
    %283 = vmatpush.xpose.msra.mxu0 0.0
    %284 = vmatpush.xpose.msra.mxu0 0.0
    %285 = vmatpush.xpose.msra.mxu0 0.0
    %286 = vmatpush.xpose.msra.mxu0 0.0
    %287 = vmatpush.xpose.msra.mxu0 %v277
    %288 = vmatpush.xpose.msra.mxu0 %v274
    %289 = vmatpush.xpose.msra.mxu0 %v271
    %290 = vmatpush.xpose.msra.mxu0 %v268
    %291 = vmatpush.xpose.msra.mxu0 %v265
    %292 = vmatpush.xpose.msra.mxu0 %v262
    %293 = vmatpush.xpose.msra.mxu0 %v259
    %294 = vmatpush.xpose.msra.mxu0 %v256
    %295 = vmatmul.f32.gmra.mxu0 %v253
    %v296 = vpop.f32.mrf.mxu0
    %v297 = vadd.f32 0.0, %v296
    %298 = vdwg.mxu0
    %vm299 = vcmask 516096
    %300 = vst.msk [vmem:[#allocation2] sm:$0x1] %vm299, %v297
    // Predicated region
    $region6: #{tpu_custom_call.1} parent=1 // pred_check
      _
    $region7: #{tpu_custom_call.1} parent=1 // pred_check_branch
      %302 = sbr.rel (0) target = $region9
    $region8: #{tpu_custom_call.1} parent=1 // pred_region
      _
    $region9: #{tpu_custom_call.1} parent=1 // pred_fallthru
      _
    // Predicated region
    $region10: #{tpu_custom_call.1} parent=1 // pred_check
      _
    $region11: #{tpu_custom_call.1} parent=1 // pred_check_branch
      %304 = sbr.rel (0) target = $region13
    $region12: #{tpu_custom_call.1} parent=1 // pred_region
      %306 = vsyncadd [#allocation3], 0
      %s308 = sshll.u32 [#allocation2], 4
      %s309 = int_to_ptr.vmem [resolvable:$true] %s308
      %s310 = sshll.u32 %s2, 4
      %s311 = int_to_ptr.hbm [resolvable:$true] %s310
      %313 = dma.vmem_to_hbm [thread:$0]  %s309, 16, %s311, [#allocation3]
    $region13: #{tpu_custom_call.1} parent=1 // pred_fallthru
      _
    // Predicated region
    $region14: #{tpu_custom_call.1} parent=1 // pred_check
      _
    $region15: #{tpu_custom_call.1} parent=1 // pred_check_branch
      %315 = sbr.rel (0) target = $region17
    $region16: #{tpu_custom_call.1} parent=1 // pred_region
      _
    $region17: #{tpu_custom_call.1} parent=1 // pred_fallthru
      _
    // Predicated region
    $region18: #{tpu_custom_call.1} parent=1 // pred_check
      _
    $region19: #{tpu_custom_call.1} parent=1 // pred_check_branch
      %317 = sbr.rel (0) target = $region21
    $region20: #{tpu_custom_call.1} parent=1 // pred_region
      %319 = dma.done [#allocation3], 16
    $region21: #{tpu_custom_call.1} parent=1 // pred_fallthru
      _
    %320 = vsyncpa [#allocation3], 1

</llo_original>
